<compile_context>
chip_gen: v5e
topology: v5e:2x2
jax: 0.10.0
libtpu: 0.0.40
codegen_flags: <defaults>
</compile_context>

<pallas_src>
import functools

import jax
import jax.numpy as jnp
from jax.experimental import pallas as pl
from jax.experimental.pallas import tpu as pltpu


LEAKY_SLOPE = 0.01   # nn.LeakyReLU() default negative_slope
LANE = 128           # lane width; D is padded to a multiple of this
SUBLANE = 8          # sublane width; N is padded to a multiple of this


def gcn_kernel(a_ref, anw_ref, arow_ref, w_in_ref, wb_in_ref, b0_ref,
               wl_ref, bl_ref, out_ref, *, num_extra):
    """One graph per grid step (batch axis squeezed out of the refs).

    a_ref    : (Np, Np)       bf16  normalized adjacency (self loops included)
    anw_ref  : (Np, 1)        f32   A_norm @ node_weight   (precomputed fold)
    arow_ref : (Np, 1)        f32   A_norm @ ones          (row sums)
    w_in_ref : (1, Dp)        f32   lin_W^T @ W0           (folded input weight)
    wb_in_ref: (1, Dp)        f32   lin_b   @ W0           (folded input bias)
    b0_ref   : (1, Dp)        f32   conv_0 bias
    wl_ref   : (L-1, Dp, Dp)  bf16  extra GraphConv weights
    bl_ref   : (L-1, 1, Dp)   f32   extra GraphConv biases
    out_ref  : (Np, Dp)       f32   node embeddings (lane-dense; wrapper slices to (N, D))
    """
    # conv_0 with the rank-1 input Linear folded through the aggregation:
    # pure VPU broadcast math, no (N,N)@(N,D) and no K=1 MXU matmul.
    h = (anw_ref[...] * w_in_ref[...]
         + arow_ref[...] * wb_in_ref[...]
         + b0_ref[...])                                          # (Np, Dp) f32

    a = a_ref[...]                                               # bf16, loaded once

    # Remaining layers: LeakyReLU -> aggregate -> project (statically unrolled).
    for l in range(num_extra):
        h = jnp.where(h > 0, h, LEAKY_SLOPE * h)                 # VPU, f32
        agg = jnp.dot(a, h.astype(jnp.bfloat16),                 # MXU bf16 in, f32 acc
                      preferred_element_type=jnp.float32)
        h = jnp.dot(agg.astype(jnp.bfloat16), wl_ref[l],
                    preferred_element_type=jnp.float32) + bl_ref[l]

    out_ref[...] = h


def gcn_forward(a_norm, node_w, lin_wt, lin_b, w0, b0, w_stack, b_stack):
    """a_norm: (B,N,N) f32 normalized adjacency, node_w: (B,N,1) f32 node weights.
    Remaining args are the module parameters (unpadded, f32)."""
    B, N, _ = a_norm.shape
    D = lin_wt.shape[1]
    num_extra = w_stack.shape[0]
    Dp = ((D + LANE - 1) // LANE) * LANE                          # lane-dense width
    Np = ((N + SUBLANE - 1) // SUBLANE) * SUBLANE                 # sublane-dense rows

    # --- pad feature dim to Dp ----------------------------------------------
    pad_d = [(0, 0), (0, Dp - D)]
    lin_wt_p = jnp.pad(lin_wt, pad_d)
    lin_b_p = jnp.pad(lin_b, pad_d)
    w0_p = jnp.pad(w0, [(0, Dp - D), (0, Dp - D)])
    b0_p = jnp.pad(b0, pad_d)
    w_stack_p = jnp.pad(w_stack, [(0, 0), (0, Dp - D), (0, Dp - D)])
    b_stack_p = jnp.pad(b_stack, [(0, 0), (0, 0), (0, Dp - D)])

    # --- pad node dim to Np (padded nodes are isolated: zero rows/cols) -----
    if Np != N:
        a_norm_p = jnp.pad(a_norm, [(0, 0), (0, Np - N), (0, Np - N)])
        node_w_p = jnp.pad(node_w, [(0, 0), (0, Np - N), (0, 0)])
    else:
        a_norm_p, node_w_p = a_norm, node_w

    # Fold the nn.Linear(1, D) input layer through conv_0 (exact algebra, tiny).
    w_in = lin_wt_p @ w0_p                                        # (1, Dp)
    wb_in = lin_b_p @ w0_p                                        # (1, Dp)
    a_nw = jnp.einsum('bij,bjk->bik', a_norm_p, node_w_p)         # (B, Np, 1)
    a_row = jnp.sum(a_norm_p, axis=-1, keepdims=True)             # (B, Np, 1)

    # bf16 inputs for the MXU dots (accumulation stays f32 inside the kernel).
    a_bf = a_norm_p.astype(jnp.bfloat16)
    w_stack_bf = w_stack_p.astype(jnp.bfloat16)

    kernel = functools.partial(gcn_kernel, num_extra=num_extra)

    out_p = pl.pallas_call(
        kernel,
        out_shape=jax.ShapeDtypeStruct((B, Np, Dp), jnp.float32),
        grid=(B,),
        in_specs=[
            pl.BlockSpec((None, Np, Np), lambda b: (b, 0, 0)),        # A (per graph)
            pl.BlockSpec((None, Np, 1), lambda b: (b, 0, 0)),         # A @ node_w
            pl.BlockSpec((None, Np, 1), lambda b: (b, 0, 0)),         # A row sums
            pl.BlockSpec((1, Dp), lambda b: (0, 0)),                  # folded input W
            pl.BlockSpec((1, Dp), lambda b: (0, 0)),                  # folded input b
            pl.BlockSpec((1, Dp), lambda b: (0, 0)),                  # conv_0 bias
            pl.BlockSpec((num_extra, Dp, Dp), lambda b: (0, 0, 0)),   # layer weights
            pl.BlockSpec((num_extra, 1, Dp), lambda b: (0, 0, 0)),    # layer biases
        ],
        out_specs=pl.BlockSpec((None, Np, Dp), lambda b: (b, 0, 0)),
        compiler_params=pltpu.CompilerParams(
            dimension_semantics=("parallel",),   # v7x: split graphs across the 2 TCs
            vmem_limit_bytes=48 * 1024 * 1024,   # above v5e/v6e scoped defaults, < v7x physical
        ),
    )(a_bf, a_nw, a_row, w_in, wb_in, b0_p, w_stack_bf, b_stack_p)

    return out_p[:, :N, :D]


def reference_forward(a_norm, node_w, lin_wt, lin_b, w0, b0, w_stack, b_stack):
    """Pure-f32 JAX reference of the original (unfolded, unpadded) module math."""
    h = node_w * lin_wt + lin_b                                   # (B,N,1)*(1,D)+(1,D)
    h = jnp.einsum('bij,bjd->bid', a_norm, h) @ w0 + b0
    for l in range(w_stack.shape[0]):
        h = jnp.where(h > 0, h, LEAKY_SLOPE * h)
        h = jnp.einsum('bij,bjd->bid', a_norm, h) @ w_stack[l] + b_stack[l]
    return h


if __name__ == "__main__":
    B = 4           # batch of graphs (grid axis)
    N = 16          # nodes per graph
    D = 32          # dim_latent
    NUM_LAYERS = 3  # conv_0 + 2 extra GraphConv layers

    key = jax.random.PRNGKey(0)
    k_adj, k_nw, k_lw, k_lb, k_w0, k_b0, k_wl, k_bl = jax.random.split(key, 8)

    # --- deterministic synthetic undirected graphs --------------------------
    adj_rand = jax.random.bernoulli(k_adj, p=0.3, shape=(B, N, N)).astype(jnp.float32)
    adj = jnp.maximum(adj_rand, jnp.swapaxes(adj_rand, -1, -2))      # symmetrize
    eye = jnp.eye(N, dtype=jnp.float32)
    adj = adj * (1.0 - eye)                                          # drop random self edges
    adj_hat = adj + eye                                              # dgl.add_self_loop
    deg = adj_hat.sum(axis=-1)
    d_inv_sqrt = 1.0 / jnp.sqrt(deg)
    # norm='both': D^{-1/2} (A + I) D^{-1/2}
    a_norm = d_inv_sqrt[:, :, None] * adj_hat * d_inv_sqrt[:, None, :]

    # --- per-node scalar weights (graph.ndata['weight']) ---------------------
    node_w = jax.random.normal(k_nw, (B, N, 1), dtype=jnp.float32)

    # --- deterministic parameter init (shapes match the PyTorch module) ------
    lin_wt = jax.random.normal(k_lw, (1, D), dtype=jnp.float32) * 0.5    # Linear(1,D).weight^T
    lin_b = jax.random.normal(k_lb, (1, D), dtype=jnp.float32) * 0.1     # Linear(1,D).bias
    w0 = jax.random.normal(k_w0, (D, D), dtype=jnp.float32) * (1.0 / jnp.sqrt(D))
    b0 = jax.random.normal(k_b0, (1, D), dtype=jnp.float32) * 0.1
    w_stack = jax.random.normal(k_wl, (NUM_LAYERS - 1, D, D), dtype=jnp.float32) * (1.0 / jnp.sqrt(D))
    b_stack = jax.random.normal(k_bl, (NUM_LAYERS - 1, 1, D), dtype=jnp.float32) * 0.1

    out = gcn_forward(a_norm, node_w, lin_wt, lin_b, w0, b0, w_stack, b_stack)
    out = jax.block_until_ready(out)

    ref = reference_forward(a_norm, node_w, lin_wt, lin_b, w0, b0, w_stack, b_stack)
    assert out.shape == (B, N, D)
    # bf16 MXU inputs (f32 accumulate) vs pure-f32 reference: allow ~1% relative error.
    rel_err = jnp.max(jnp.abs(out - ref)) / jnp.maximum(jnp.max(jnp.abs(ref)), 1e-6)
    assert rel_err < 5e-2, f"mismatch vs JAX reference: rel_err={rel_err}"

    print("KERNEL_OK")
</pallas_src>

<mosaic_0001>
module attributes {stable_mosaic.version = 11 : i64} {
  func.func @gcn_kernel(%arg0: i32, %arg1: memref<1x16x16xbf16, #tpu.memory_space<vmem>>, %arg2: memref<1x16x1xf32, #tpu.memory_space<vmem>>, %arg3: memref<1x16x1xf32, #tpu.memory_space<vmem>>, %arg4: memref<1x128xf32, #tpu.memory_space<vmem>>, %arg5: memref<1x128xf32, #tpu.memory_space<vmem>>, %arg6: memref<1x128xf32, #tpu.memory_space<vmem>>, %arg7: memref<2x128x128xbf16, #tpu.memory_space<vmem>>, %arg8: memref<2x1x128xf32, #tpu.memory_space<vmem>>, %arg9: memref<1x16x128xf32, #tpu.memory_space<vmem>>) attributes {dimension_semantics = [#tpu.dimension_semantics<parallel>], iteration_bounds = array<i64: 4>, scalar_prefetch = 0 : i64, scratch_operands = 0 : i64, tpu.core_type = #tpu.core_type<tc>, window_params = [{transform_indices = @transform_0, window_bounds = array<i64: 1, 16, 16>}, {transform_indices = @transform_1, window_bounds = array<i64: 1, 16, 1>}, {transform_indices = @transform_2, window_bounds = array<i64: 1, 16, 1>}, {pipeline_mode = #tpu.pipeline_mode<synchronous>, transform_indices = @transform_3, window_bounds = array<i64: 1, 128>}, {pipeline_mode = #tpu.pipeline_mode<synchronous>, transform_indices = @transform_4, window_bounds = array<i64: 1, 128>}, {pipeline_mode = #tpu.pipeline_mode<synchronous>, transform_indices = @transform_5, window_bounds = array<i64: 1, 128>}, {pipeline_mode = #tpu.pipeline_mode<synchronous>, transform_indices = @transform_6, window_bounds = array<i64: 2, 128, 128>}, {pipeline_mode = #tpu.pipeline_mode<synchronous>, transform_indices = @transform_7, window_bounds = array<i64: 2, 1, 128>}, {transform_indices = @transform_8, window_bounds = array<i64: 1, 16, 128>}]} {
    %c0 = arith.constant 0 : index
    %c0_0 = arith.constant 0 : index
    %c0_1 = arith.constant 0 : index
    %0 = vector.load %arg2[%c0, %c0_0, %c0_1] : memref<1x16x1xf32, #tpu.memory_space<vmem>>, vector<1x16x1xf32>
    %1 = vector.shape_cast %0 : vector<1x16x1xf32> to vector<16x1xf32>
    %c0_2 = arith.constant 0 : index
    %c0_3 = arith.constant 0 : index
    %2 = vector.load %arg4[%c0_2, %c0_3] : memref<1x128xf32, #tpu.memory_space<vmem>>, vector<1x128xf32>
    %3 = vector.broadcast %1 : vector<16x1xf32> to vector<16x128xf32>
    %4 = vector.broadcast %2 : vector<1x128xf32> to vector<16x128xf32>
    %5 = arith.mulf %3, %4 : vector<16x128xf32>
    %c0_4 = arith.constant 0 : index
    %c0_5 = arith.constant 0 : index
    %c0_6 = arith.constant 0 : index
    %6 = vector.load %arg3[%c0_4, %c0_5, %c0_6] : memref<1x16x1xf32, #tpu.memory_space<vmem>>, vector<1x16x1xf32>
    %7 = vector.shape_cast %6 : vector<1x16x1xf32> to vector<16x1xf32>
    %c0_7 = arith.constant 0 : index
    %c0_8 = arith.constant 0 : index
    %8 = vector.load %arg5[%c0_7, %c0_8] : memref<1x128xf32, #tpu.memory_space<vmem>>, vector<1x128xf32>
    %9 = vector.broadcast %7 : vector<16x1xf32> to vector<16x128xf32>
    %10 = vector.broadcast %8 : vector<1x128xf32> to vector<16x128xf32>
    %11 = arith.mulf %9, %10 : vector<16x128xf32>
    %12 = arith.addf %5, %11 : vector<16x128xf32>
    %c0_9 = arith.constant 0 : index
    %c0_10 = arith.constant 0 : index
    %13 = vector.load %arg6[%c0_9, %c0_10] : memref<1x128xf32, #tpu.memory_space<vmem>>, vector<1x128xf32>
    %14 = vector.broadcast %13 : vector<1x128xf32> to vector<16x128xf32>
    %15 = arith.addf %12, %14 : vector<16x128xf32>
    %c0_11 = arith.constant 0 : index
    %c0_12 = arith.constant 0 : index
    %c0_13 = arith.constant 0 : index
    %16 = vector.load %arg1[%c0_11, %c0_12, %c0_13] : memref<1x16x16xbf16, #tpu.memory_space<vmem>>, vector<1x16x16xbf16>
    %17 = vector.shape_cast %16 : vector<1x16x16xbf16> to vector<16x16xbf16>
    %cst = arith.constant 0.000000e+00 : f32
    %18 = vector.broadcast %cst : f32 to vector<16x128xf32>
    %19 = arith.cmpf ogt, %15, %18 : vector<16x128xf32>
    %cst_14 = arith.constant 0.00999999977 : f32
    %20 = vector.broadcast %cst_14 : f32 to vector<16x128xf32>
    %21 = arith.mulf %20, %15 : vector<16x128xf32>
    %22 = arith.select %19, %15, %21 : vector<16x128xi1>, vector<16x128xf32>
    %23 = arith.truncf %22 : vector<16x128xf32> to vector<16x128xbf16>
    %cst_15 = arith.constant dense<0.000000e+00> : vector<16x128xf32>
    %24 = tpu.matmul %17, %23, %cst_15 {dimension_numbers = #tpu.dot_dimension_numbers<[1], [0], [0], [1], [0, 0, 1, 1], [], []>} : vector<16x16xbf16>, vector<16x128xbf16>, vector<16x128xf32> -> vector<16x128xf32>
    %25 = arith.truncf %24 : vector<16x128xf32> to vector<16x128xbf16>
    %c0_16 = arith.constant 0 : index
    %c0_17 = arith.constant 0 : index
    %c0_18 = arith.constant 0 : index
    %26 = vector.load %arg7[%c0_16, %c0_17, %c0_18] : memref<2x128x128xbf16, #tpu.memory_space<vmem>>, vector<1x128x128xbf16>
    %27 = vector.shape_cast %26 : vector<1x128x128xbf16> to vector<128x128xbf16>
    %cst_19 = arith.constant dense<0.000000e+00> : vector<16x128xf32>
    %28 = tpu.matmul %25, %27, %cst_19 {dimension_numbers = #tpu.dot_dimension_numbers<[1], [0], [0], [1], [0, 0, 1, 1], [], []>} : vector<16x128xbf16>, vector<128x128xbf16>, vector<16x128xf32> -> vector<16x128xf32>
    %c0_20 = arith.constant 0 : index
    %c0_21 = arith.constant 0 : index
    %c0_22 = arith.constant 0 : index
    %29 = vector.load %arg8[%c0_20, %c0_21, %c0_22] : memref<2x1x128xf32, #tpu.memory_space<vmem>>, vector<1x1x128xf32>
    %30 = vector.shape_cast %29 : vector<1x1x128xf32> to vector<1x128xf32>
    %31 = vector.broadcast %30 : vector<1x128xf32> to vector<16x128xf32>
    %32 = arith.addf %28, %31 : vector<16x128xf32>
    %cst_23 = arith.constant 0.000000e+00 : f32
    %33 = vector.broadcast %cst_23 : f32 to vector<16x128xf32>
    %34 = arith.cmpf ogt, %32, %33 : vector<16x128xf32>
    %cst_24 = arith.constant 0.00999999977 : f32
    %35 = vector.broadcast %cst_24 : f32 to vector<16x128xf32>
    %36 = arith.mulf %35, %32 : vector<16x128xf32>
    %37 = arith.select %34, %32, %36 : vector<16x128xi1>, vector<16x128xf32>
    %38 = arith.truncf %37 : vector<16x128xf32> to vector<16x128xbf16>
    %cst_25 = arith.constant dense<0.000000e+00> : vector<16x128xf32>
    %39 = tpu.matmul %17, %38, %cst_25 {dimension_numbers = #tpu.dot_dimension_numbers<[1], [0], [0], [1], [0, 0, 1, 1], [], []>} : vector<16x16xbf16>, vector<16x128xbf16>, vector<16x128xf32> -> vector<16x128xf32>
    %40 = arith.truncf %39 : vector<16x128xf32> to vector<16x128xbf16>
    %c1 = arith.constant 1 : index
    %c0_26 = arith.constant 0 : index
    %c0_27 = arith.constant 0 : index
    %41 = vector.load %arg7[%c1, %c0_26, %c0_27] : memref<2x128x128xbf16, #tpu.memory_space<vmem>>, vector<1x128x128xbf16>
    %42 = vector.shape_cast %41 : vector<1x128x128xbf16> to vector<128x128xbf16>
    %cst_28 = arith.constant dense<0.000000e+00> : vector<16x128xf32>
    %43 = tpu.matmul %40, %42, %cst_28 {dimension_numbers = #tpu.dot_dimension_numbers<[1], [0], [0], [1], [0, 0, 1, 1], [], []>} : vector<16x128xbf16>, vector<128x128xbf16>, vector<16x128xf32> -> vector<16x128xf32>
    %c1_29 = arith.constant 1 : index
    %c0_30 = arith.constant 0 : index
    %c0_31 = arith.constant 0 : index
    %44 = vector.load %arg8[%c1_29, %c0_30, %c0_31] : memref<2x1x128xf32, #tpu.memory_space<vmem>>, vector<1x1x128xf32>
    %45 = vector.shape_cast %44 : vector<1x1x128xf32> to vector<1x128xf32>
    %46 = vector.broadcast %45 : vector<1x128xf32> to vector<16x128xf32>
    %47 = arith.addf %43, %46 : vector<16x128xf32>
    %c0_32 = arith.constant 0 : index
    %c0_33 = arith.constant 0 : index
    %c0_34 = arith.constant 0 : index
    %48 = vector.load %arg9[%c0_32, %c0_33, %c0_34] : memref<1x16x128xf32, #tpu.memory_space<vmem>>, vector<1x16x128xf32>
    %49 = vector.shape_cast %48 : vector<1x16x128xf32> to vector<16x128xf32>
    %50 = vector.shape_cast %47 : vector<16x128xf32> to vector<1x16x128xf32>
    tpu.vector_store %arg9[%c0_32, %c0_33, %c0_34], %50 {strides = array<i32>} : memref<1x16x128xf32, #tpu.memory_space<vmem>>, vector<1x16x128xf32>,
    return
  }
  func.func @transform_0(%arg0: i32) -> (i32, i32, i32) {
    %c0_i32 = arith.constant 0 : i32
    %c0_i32_0 = arith.constant 0 : i32
    %c0_i32_1 = arith.constant 0 : i32
    return %arg0, %c0_i32, %c0_i32_0 : i32, i32, i32
  }
  func.func @transform_1(%arg0: i32) -> (i32, i32, i32) {
    %c0_i32 = arith.constant 0 : i32
    %c0_i32_0 = arith.constant 0 : i32
    %c0_i32_1 = arith.constant 0 : i32
    return %arg0, %c0_i32, %c0_i32_0 : i32, i32, i32
  }
  func.func @transform_2(%arg0: i32) -> (i32, i32, i32) {
    %c0_i32 = arith.constant 0 : i32
    %c0_i32_0 = arith.constant 0 : i32
    %c0_i32_1 = arith.constant 0 : i32
    return %arg0, %c0_i32, %c0_i32_0 : i32, i32, i32
  }
  func.func @transform_3(%arg0: i32) -> (i32, i32) {
    %c0_i32 = arith.constant 0 : i32
    %c0_i32_0 = arith.constant 0 : i32
    %c0_i32_1 = arith.constant 0 : i32
    return %c0_i32, %c0_i32_0 : i32, i32
  }
  func.func @transform_4(%arg0: i32) -> (i32, i32) {
    %c0_i32 = arith.constant 0 : i32
    %c0_i32_0 = arith.constant 0 : i32
    %c0_i32_1 = arith.constant 0 : i32
    return %c0_i32, %c0_i32_0 : i32, i32
  }
  func.func @transform_5(%arg0: i32) -> (i32, i32) {
    %c0_i32 = arith.constant 0 : i32
    %c0_i32_0 = arith.constant 0 : i32
    %c0_i32_1 = arith.constant 0 : i32
    return %c0_i32, %c0_i32_0 : i32, i32
  }
  func.func @transform_6(%arg0: i32) -> (i32, i32, i32) {
    %c0_i32 = arith.constant 0 : i32
    %c0_i32_0 = arith.constant 0 : i32
    %c0_i32_1 = arith.constant 0 : i32
    %c0_i32_2 = arith.constant 0 : i32
    return %c0_i32, %c0_i32_0, %c0_i32_1 : i32, i32, i32
  }
  func.func @transform_7(%arg0: i32) -> (i32, i32, i32) {
    %c0_i32 = arith.constant 0 : i32
    %c0_i32_0 = arith.constant 0 : i32
    %c0_i32_1 = arith.constant 0 : i32
    %c0_i32_2 = arith.constant 0 : i32
    return %c0_i32, %c0_i32_0, %c0_i32_1 : i32, i32, i32
  }
  func.func @transform_8(%arg0: i32) -> (i32, i32, i32) {
    %c0_i32 = arith.constant 0 : i32
    %c0_i32_0 = arith.constant 0 : i32
    %c0_i32_1 = arith.constant 0 : i32
    return %arg0, %c0_i32, %c0_i32_0 : i32, i32, i32
  }
}

</mosaic_0001>

<llo_original>
// kernel: tpu_custom_call.1
$region0: #{tpu_custom_call.1}
  #allocation0 [shape = 'u32[]', space=smem, size = 0x4, offset = 0x4, fixed_abs, tag = 'smem constant byte address 0x4 - core index']
  #allocation1 [shape = 'u32[72,128]{1,0:T(1,128)}', space=vmem, size = 0x9000, scoped, tag = 'internal scratch']
  %s0 = inlined_call_operand.hbm [shape: bf16[4,16,16], index: 0, kind: input, shape index: {}]
  %s1 = inlined_call_operand.vmem [shape: f32[4,16,1], index: 1, kind: input, shape index: {}]
  %s2 = inlined_call_operand.vmem [shape: f32[4,16,1], index: 2, kind: input, shape index: {}]
  %s3 = inlined_call_operand.vmem [shape: f32[1,128], index: 3, kind: input, shape index: {}]
  %s4 = inlined_call_operand.vmem [shape: f32[1,128], index: 4, kind: input, shape index: {}]
  %s5 = inlined_call_operand.vmem [shape: f32[1,128], index: 5, kind: input, shape index: {}]
  %s6 = inlined_call_operand.vmem [shape: bf16[2,128,128], index: 6, kind: input, shape index: {}]
  %s7 = inlined_call_operand.vmem [shape: f32[2,1,128], index: 7, kind: input, shape index: {}]
  %s8 = inlined_call_operand.hbm [shape: f32[4,16,128], index: 8, kind: output, shape index: {}]
  %s9 = sld [smem:[#allocation0]]
  $region69: #{tpu_custom_call.1} parent=0
    _
  %s11 = ssub.s32 1, %s9
  %s12 = scalar_select 0, %s11, %s9
  $region1: #{tpu_custom_call.1} parent=0
    #allocation2 [shape = 'u8[8192]{0}', space=vmem, size = 0x2000, scoped, tag = 'input window, operand 0']
    #allocation3 [shape = 's32[2]{0}', space=sflag, size = 0x8, scoped, tag = 'scoped memory for tpu_custom_call.1']
    #allocation4 [shape = 's32[2]{0}', space=sflag, size = 0x8, scoped, tag = 'scoped memory for tpu_custom_call.1']
    #allocation5 [shape = 'u8[16384]{0}', space=vmem, size = 0x4000, scoped, tag = 'output window, operand 0']
    %13 = vsyncpa [#allocation3], 0
    %s14 = scalar_lea.sflag [#allocation3], 1
    %15 = vsyncpa %s14, 0
    %16 = vsyncpa [#allocation4], 0
    %s17 = scalar_lea.sflag [#allocation4], 1
    %18 = vsyncpa %s17, 0
    loop: start=0, step=1, limit=6
    $region2: #{tpu_custom_call.1} parent=1 // loop_pre_header
      _
    $region3: #{tpu_custom_call.1} parent=1 // loop_header
      %s20 = sphi 0, %s24
      %p21 = scmp.ge.s32.totalorder %s20, 6
      %s30 = sphi 0, %s32
      %s33 = sphi 0, %s30
      %s34 = sphi 0, %s33
      %s50 = sphi 0, %s34
      %s56 = sphi 0, %s58
      %s59 = sphi 0, %s56
      %s60 = sphi 0, %s59
      %s76 = sphi 0, %s60
      %s82 = sphi 0, %s84
      %s85 = sphi 0, %s82
      %s86 = sphi 0, %s85
      %s102 = sphi 0, %s86
      %s106 = sphi 0, %s106
      %s108 = sphi 0, %s106
      %s109 = sphi 0, %s108
      %s123 = sphi 0, %s109
      %s127 = sphi 0, %s127
      %s129 = sphi 0, %s127
      %s130 = sphi 0, %s129
      %s144 = sphi 0, %s130
      %s148 = sphi 0, %s148
      %s150 = sphi 0, %s148
      %s151 = sphi 0, %s150
      %s165 = sphi 0, %s151
      %s169 = sphi 0, %s169
      %s171 = sphi 0, %s169
      %s172 = sphi 0, %s171
      %s186 = sphi 0, %s172
      %s190 = sphi 0, %s190
      %s192 = sphi 0, %s190
      %s193 = sphi 0, %s192
      %s207 = sphi 0, %s193
      %s213 = sphi 0, %s215
      %s216 = sphi 0, %s213
      %s217 = sphi 0, %s216
      %s233 = sphi 0, %s217
    $region4: #{tpu_custom_call.1} parent=1 // loop_header_branch
      %23 = sbr.rel (%p21) target = $region8
    $region5: #{tpu_custom_call.1} parent=1 // loop_body
      %s25 = ssub.s32 %s20, 1
      %s26 = ssub.s32 %s20, 2
      %s27 = sadd.s32 %s20, 1
      %s28 = ssub.s32 %s20, %s27
      %p29 = scmp.eq.s32.totalorder %s28, 0
      %s31 = sadd.s32 %s30, 1
      %s32 = scalar_select %p29, %s30, %s31
      %p35 = pneg %p29
      %p36 = scmp.eq.s32.totalorder %s20, 3
      %p37 = por %p35, %p36
      %p38 = scmp.ne.s32.totalorder %s30, %s33
      %p39 = scmp.eq.s32.totalorder %s20, 0
      %p40 = por %p38, %p39
      %p41 = scmp.ne.s32.totalorder %s30, %s33
      %p42 = scmp.eq.s32.totalorder %s25, 3
      %p43 = por %p41, %p42
      %p44 = scmp.ne.s32.totalorder %s33, %s34
      %p45 = scmp.eq.s32.totalorder %s25, 0
      %p46 = por %p44, %p45
      %p47 = scmp.ne.s32.totalorder %s33, %s34
      %p48 = scmp.eq.s32.totalorder %s26, 3
      %p49 = por %p47, %p48
      %p51 = scmp.ne.s32.totalorder %s34, %s50
      %p52 = scmp.eq.s32.totalorder %s26, 0
      %p53 = por %p51, %p52
      %s54 = ssub.s32 %s20, %s27
      %p55 = scmp.eq.s32.totalorder %s54, 0
      %s57 = sadd.s32 %s56, 1
      %s58 = scalar_select %p55, %s56, %s57
      %p61 = pneg %p55
      %p62 = scmp.eq.s32.totalorder %s20, 3
      %p63 = por %p61, %p62
      %p64 = scmp.ne.s32.totalorder %s56, %s59
      %p65 = scmp.eq.s32.totalorder %s20, 0
      %p66 = por %p64, %p65
      %p67 = scmp.ne.s32.totalorder %s56, %s59
      %p68 = scmp.eq.s32.totalorder %s25, 3
      %p69 = por %p67, %p68
      %p70 = scmp.ne.s32.totalorder %s59, %s60
      %p71 = scmp.eq.s32.totalorder %s25, 0
      %p72 = por %p70, %p71
      %p73 = scmp.ne.s32.totalorder %s59, %s60
      %p74 = scmp.eq.s32.totalorder %s26, 3
      %p75 = por %p73, %p74
      %p77 = scmp.ne.s32.totalorder %s60, %s76
      %p78 = scmp.eq.s32.totalorder %s26, 0
      %p79 = por %p77, %p78
      %s80 = ssub.s32 %s20, %s27
      %p81 = scmp.eq.s32.totalorder %s80, 0
      %s83 = sadd.s32 %s82, 1
      %s84 = scalar_select %p81, %s82, %s83
      %p87 = pneg %p81
      %p88 = scmp.eq.s32.totalorder %s20, 3
      %p89 = por %p87, %p88
      %p90 = scmp.ne.s32.totalorder %s82, %s85
      %p91 = scmp.eq.s32.totalorder %s20, 0
      %p92 = por %p90, %p91
      %p93 = scmp.ne.s32.totalorder %s82, %s85
      %p94 = scmp.eq.s32.totalorder %s25, 3
      %p95 = por %p93, %p94
      %p96 = scmp.ne.s32.totalorder %s85, %s86
      %p97 = scmp.eq.s32.totalorder %s25, 0
      %p98 = por %p96, %p97
      %p99 = scmp.ne.s32.totalorder %s85, %s86
      %p100 = scmp.eq.s32.totalorder %s26, 3
      %p101 = por %p99, %p100
      %p103 = scmp.ne.s32.totalorder %s86, %s102
      %p104 = scmp.eq.s32.totalorder %s26, 0
      %p105 = por %p103, %p104
      %s107 = sadd.s32 %s106, 1
      %p110 = scmp.eq.s32.totalorder %s20, 3
      %p111 = scmp.ne.s32.totalorder %s106, %s108
      %p112 = scmp.eq.s32.totalorder %s20, 0
      %p113 = por %p111, %p112
      %p114 = scmp.ne.s32.totalorder %s106, %s108
      %p115 = scmp.eq.s32.totalorder %s25, 3
      %p116 = por %p114, %p115
      %p117 = scmp.ne.s32.totalorder %s108, %s109
      %p118 = scmp.eq.s32.totalorder %s25, 0
      %p119 = por %p117, %p118
      %p120 = scmp.ne.s32.totalorder %s108, %s109
      %p121 = scmp.eq.s32.totalorder %s26, 3
      %p122 = por %p120, %p121
      %p124 = scmp.ne.s32.totalorder %s109, %s123
      %p125 = scmp.eq.s32.totalorder %s26, 0
      %p126 = por %p124, %p125
      %s128 = sadd.s32 %s127, 1
      %p131 = scmp.eq.s32.totalorder %s20, 3
      %p132 = scmp.ne.s32.totalorder %s127, %s129
      %p133 = scmp.eq.s32.totalorder %s20, 0
      %p134 = por %p132, %p133
      %p135 = scmp.ne.s32.totalorder %s127, %s129
      %p136 = scmp.eq.s32.totalorder %s25, 3
      %p137 = por %p135, %p136
      %p138 = scmp.ne.s32.totalorder %s129, %s130
      %p139 = scmp.eq.s32.totalorder %s25, 0
      %p140 = por %p138, %p139
      %p141 = scmp.ne.s32.totalorder %s129, %s130
      %p142 = scmp.eq.s32.totalorder %s26, 3
      %p143 = por %p141, %p142
      %p145 = scmp.ne.s32.totalorder %s130, %s144
      %p146 = scmp.eq.s32.totalorder %s26, 0
      %p147 = por %p145, %p146
      %s149 = sadd.s32 %s148, 1
      %p152 = scmp.eq.s32.totalorder %s20, 3
      %p153 = scmp.ne.s32.totalorder %s148, %s150
      %p154 = scmp.eq.s32.totalorder %s20, 0
      %p155 = por %p153, %p154
      %p156 = scmp.ne.s32.totalorder %s148, %s150
      %p157 = scmp.eq.s32.totalorder %s25, 3
      %p158 = por %p156, %p157
      %p159 = scmp.ne.s32.totalorder %s150, %s151
      %p160 = scmp.eq.s32.totalorder %s25, 0
      %p161 = por %p159, %p160
      %p162 = scmp.ne.s32.totalorder %s150, %s151
      %p163 = scmp.eq.s32.totalorder %s26, 3
      %p164 = por %p162, %p163
      %p166 = scmp.ne.s32.totalorder %s151, %s165
      %p167 = scmp.eq.s32.totalorder %s26, 0
      %p168 = por %p166, %p167
      %s170 = sadd.s32 %s169, 1
      %p173 = scmp.eq.s32.totalorder %s20, 3
      %p174 = scmp.ne.s32.totalorder %s169, %s171
      %p175 = scmp.eq.s32.totalorder %s20, 0
      %p176 = por %p174, %p175
      %p177 = scmp.ne.s32.totalorder %s169, %s171
      %p178 = scmp.eq.s32.totalorder %s25, 3
      %p179 = por %p177, %p178
      %p180 = scmp.ne.s32.totalorder %s171, %s172
      %p181 = scmp.eq.s32.totalorder %s25, 0
      %p182 = por %p180, %p181
      %p183 = scmp.ne.s32.totalorder %s171, %s172
      %p184 = scmp.eq.s32.totalorder %s26, 3
      %p185 = por %p183, %p184
      %p187 = scmp.ne.s32.totalorder %s172, %s186
      %p188 = scmp.eq.s32.totalorder %s26, 0
      %p189 = por %p187, %p188
      %s191 = sadd.s32 %s190, 1
      %p194 = scmp.eq.s32.totalorder %s20, 3
      %p195 = scmp.ne.s32.totalorder %s190, %s192
      %p196 = scmp.eq.s32.totalorder %s20, 0
      %p197 = por %p195, %p196
      %p198 = scmp.ne.s32.totalorder %s190, %s192
      %p199 = scmp.eq.s32.totalorder %s25, 3
      %p200 = por %p198, %p199
      %p201 = scmp.ne.s32.totalorder %s192, %s193
      %p202 = scmp.eq.s32.totalorder %s25, 0
      %p203 = por %p201, %p202
      %p204 = scmp.ne.s32.totalorder %s192, %s193
      %p205 = scmp.eq.s32.totalorder %s26, 3
      %p206 = por %p204, %p205
      %p208 = scmp.ne.s32.totalorder %s193, %s207
      %p209 = scmp.eq.s32.totalorder %s26, 0
      %p210 = por %p208, %p209
      %s211 = ssub.s32 %s20, %s27
      %p212 = scmp.eq.s32.totalorder %s211, 0
      %s214 = sadd.s32 %s213, 1
      %s215 = scalar_select %p212, %s213, %s214
      %p218 = pneg %p212
      %p219 = scmp.eq.s32.totalorder %s20, 3
      %p220 = por %p218, %p219
      %p221 = scmp.ne.s32.totalorder %s213, %s216
      %p222 = scmp.eq.s32.totalorder %s20, 0
      %p223 = por %p221, %p222
      %p224 = scmp.ne.s32.totalorder %s213, %s216
      %p225 = scmp.eq.s32.totalorder %s25, 3
      %p226 = por %p224, %p225
      %p227 = scmp.ne.s32.totalorder %s216, %s217
      %p228 = scmp.eq.s32.totalorder %s25, 0
      %p229 = por %p227, %p228
      %p230 = scmp.ne.s32.totalorder %s216, %s217
      %p231 = scmp.eq.s32.totalorder %s26, 3
      %p232 = por %p230, %p231
      %p234 = scmp.ne.s32.totalorder %s217, %s233
      %p235 = scmp.eq.s32.totalorder %s26, 0
      %p236 = por %p234, %p235
      %p237 = scmp.le.s32.totalorder 1, %s20
      %p238 = scmp.lt.s32.totalorder %s20, 5
      %p239 = pnand %p237, %p238
      %p240 = pneg %p239
      // Predicated region
      $region9: #{tpu_custom_call.1} parent=5 // pred_check
        _
      $region10: #{tpu_custom_call.1} parent=5 // pred_check_branch
        %242 = sbr.rel (%p239) target = $region12
      $region11: #{tpu_custom_call.1} parent=5 // pred_region
        %s243 = ssub.s32 %s20, 1
        // Predicated region
        $region13: #{tpu_custom_call.1} parent=11 // pred_check
          %p244 = pneg %p119
        $region14: #{tpu_custom_call.1} parent=11 // pred_check_branch
          %246 = sbr.rel (%p244) target = $region16
        $region15: #{tpu_custom_call.1} parent=11 // pred_region
          _
        $region16: #{tpu_custom_call.1} parent=11 // pred_fallthru
          _
        // Predicated region
        $region17: #{tpu_custom_call.1} parent=11 // pred_check
          %p247 = pneg %p140
        $region18: #{tpu_custom_call.1} parent=11 // pred_check_branch
          %249 = sbr.rel (%p247) target = $region20
        $region19: #{tpu_custom_call.1} parent=11 // pred_region
          _
        $region20: #{tpu_custom_call.1} parent=11 // pred_fallthru
          _
        // Predicated region
        $region21: #{tpu_custom_call.1} parent=11 // pred_check
          %p250 = pneg %p161
        $region22: #{tpu_custom_call.1} parent=11 // pred_check_branch
          %252 = sbr.rel (%p250) target = $region24
        $region23: #{tpu_custom_call.1} parent=11 // pred_region
          _
        $region24: #{tpu_custom_call.1} parent=11 // pred_fallthru
          _
        // Predicated region
        $region25: #{tpu_custom_call.1} parent=11 // pred_check
          %p253 = pneg %p182
        $region26: #{tpu_custom_call.1} parent=11 // pred_check_branch
          %255 = sbr.rel (%p253) target = $region28
        $region27: #{tpu_custom_call.1} parent=11 // pred_region
          _
        $region28: #{tpu_custom_call.1} parent=11 // pred_fallthru
          _
        // Predicated region
        $region29: #{tpu_custom_call.1} parent=11 // pred_check
          %p256 = pneg %p203
        $region30: #{tpu_custom_call.1} parent=11 // pred_check_branch
          %258 = sbr.rel (%p256) target = $region32
        $region31: #{tpu_custom_call.1} parent=11 // pred_region
          _
        $region32: #{tpu_custom_call.1} parent=11 // pred_fallthru
          _
      $region12: #{tpu_custom_call.1} parent=5 // pred_fallthru
        _
      %p259 = scmp.lt.s32.totalorder %s20, 4
      // Predicated region
      $region33: #{tpu_custom_call.1} parent=5 // pred_check
        %p260 = pneg %p259
      $region34: #{tpu_custom_call.1} parent=5 // pred_check_branch
        %262 = sbr.rel (%p260) target = $region36
      $region35: #{tpu_custom_call.1} parent=5 // pred_region
        // Predicated region
        $region37: #{tpu_custom_call.1} parent=35 // pred_check
          %p263 = pneg %p40
        $region38: #{tpu_custom_call.1} parent=35 // pred_check_branch
          %265 = sbr.rel (%p263) target = $region40
        $region39: #{tpu_custom_call.1} parent=35 // pred_region
          %s266 = sand.u32 %s30, 1
          %s267 = scalar_lea.sflag [#allocation3], %s266
          %s268 = sand.u32 %s30, 1
          %s269 = smul.addr %s268, 8
          %s270 = scalar_lea.vmem [#allocation2], %s269
          %272 = vsyncadd %s267, 0
          %s273 = smul.addr %s20, 2
          %s274 = smul.addr %s273, 4
          %s275 = scalar_lea.hbm %s0, %s274
          %s276 = sshll.u32 %s275, 4
          %s277 = int_to_ptr.hbm [resolvable:$true] %s276
          %s278 = sshll.u32 %s270, 4
          %s279 = int_to_ptr.vmem [resolvable:$true] %s278
          %284 = dma.hbm_to_vmem [thread:$0]  %s277, 128, %s279, %s267, 64, 64, 4
        $region40: #{tpu_custom_call.1} parent=35 // pred_fallthru
          _
        // Predicated region
        $region41: #{tpu_custom_call.1} parent=35 // pred_check
          %p285 = pneg %p66
        $region42: #{tpu_custom_call.1} parent=35 // pred_check_branch
          %287 = sbr.rel (%p285) target = $region44
        $region43: #{tpu_custom_call.1} parent=35 // pred_region
          %p288 = scmp.lt.s32.totalorder %s20, 3
          %s289 = scalar_select %p288, %s20, 3
          %s290 = smul.addr %s289, 2
          %s291 = smul.addr %s290, 8
          %s292 = scalar_lea.vmem %s1, %s291
        $region44: #{tpu_custom_call.1} parent=35 // pred_fallthru
          _
        // Predicated region
        $region45: #{tpu_custom_call.1} parent=35 // pred_check
          %p293 = pneg %p92
        $region46: #{tpu_custom_call.1} parent=35 // pred_check_branch
          %295 = sbr.rel (%p293) target = $region48
        $region47: #{tpu_custom_call.1} parent=35 // pred_region
          %p296 = scmp.lt.s32.totalorder %s20, 3
          %s297 = scalar_select %p296, %s20, 3
          %s298 = smul.addr %s297, 2
          %s299 = smul.addr %s298, 8
          %s300 = scalar_lea.vmem %s2, %s299
        $region48: #{tpu_custom_call.1} parent=35 // pred_fallthru
          _
      $region36: #{tpu_custom_call.1} parent=5 // pred_fallthru
        _
      %p301 = scmp.le.s32.totalorder 1, %s20
      %p302 = scmp.lt.s32.totalorder %s20, 5
      %p303 = pnand %p301, %p302
      %p304 = pneg %p303
      // Predicated region
      $region49: #{tpu_custom_call.1} parent=5 // pred_check
        _
      $region50: #{tpu_custom_call.1} parent=5 // pred_check_branch
        %306 = sbr.rel (%p303) target = $region52
      $region51: #{tpu_custom_call.1} parent=5 // pred_region
        %s307 = ssub.s32 %s20, 1
        %s308 = sand.u32 %s33, 1
        %s309 = scalar_lea.sflag [#allocation3], %s308
        %s310 = sand.u32 %s33, 1
        %s311 = smul.addr %s310, 8
        %s312 = scalar_lea.vmem [#allocation2], %s311
        // Predicated region
        $region53: #{tpu_custom_call.1} parent=51 // pred_check
          %p313 = pneg %p46
        $region54: #{tpu_custom_call.1} parent=51 // pred_check_branch
          %315 = sbr.rel (%p313) target = $region56
        $region55: #{tpu_custom_call.1} parent=51 // pred_region
          %317 = dma.done %s309, 128
        $region56: #{tpu_custom_call.1} parent=51 // pred_fallthru
          _
        %s318 = sand.u32 %s33, 1
        %s319 = scalar_lea.sflag [#allocation3], %s318
        %s320 = sand.u32 %s33, 1
        %s321 = smul.addr %s320, 8
        %s322 = scalar_lea.vmem [#allocation2], %s321
        %p323 = pneg %p46
        %p324 = pneg %p43
        %p325 = scmp.lt.s32.totalorder %s25, 3
        %s326 = scalar_select %p325, %s25, 3
        %s327 = smul.addr %s326, 2
        %s328 = smul.addr %s327, 8
        %s329 = scalar_lea.vmem %s1, %s328
        %p330 = pneg %p72
        %p331 = pneg %p69
        %p332 = scmp.lt.s32.totalorder %s25, 3
        %s333 = scalar_select %p332, %s25, 3
        %s334 = smul.addr %s333, 2
        %s335 = smul.addr %s334, 8
        %s336 = scalar_lea.vmem %s2, %s335
        %p337 = pneg %p98
        %p338 = pneg %p95
        %p339 = pneg %p119
        %p340 = pneg %p116
        %p341 = pneg %p140
        %p342 = pneg %p137
        %p343 = pneg %p161
        %p344 = pneg %p158
        %p345 = pneg %p182
        %p346 = pneg %p179
        %p347 = pneg %p203
        %p348 = pneg %p200
        %p349 = pneg %p229
        %p350 = pneg %p226
        %s351 = sand.u32 %s216, 1
        %s352 = scalar_lea.sflag [#allocation4], %s351
        %s353 = sand.u32 %s216, 1
        %s354 = smul.addr %s353, 16
        %s355 = scalar_lea.vmem [#allocation5], %s354
        %p356 = scmp.lt.s32.totalorder %s25, 3
        %s357 = scalar_select %p356, %s25, 3
        %s358 = smul.addr %s357, 2
        %s359 = smul.addr %s358, 8
        %s360 = scalar_lea.vmem %s1, %s359
        %p361 = scmp.lt.s32.totalorder %s25, 3
        %s362 = scalar_select %p361, %s25, 3
        %s363 = smul.addr %s362, 2
        %s364 = smul.addr %s363, 8
        %s365 = scalar_lea.vmem %s2, %s364
        %v367 = vld [vmem:[%s360] sm:$0xff]
        %v368 = vld [vmem:[%s360 + $0x8] sm:$0xff]
        %v369 = vld [vmem:[%s3] sm:$0x1]
        %371 = vset.pattern.permute.xlu0 0
        %372 = vperm.xlu0 %371, %v367
        %v373 = vpop.permute.xlu0 %372
        %376 = vset.pattern.permute.xlu0 0
        %377 = vperm.xlu0 %376, %v368
        %v378 = vpop.permute.xlu0 %377
        %v381 = vperm.slane %v369, 0
        %v383 = vmul.f32 %v373, %v381
        %v384 = vmul.f32 %v378, %v381
        %v385 = vld [vmem:[%s365] sm:$0xff]
        %v386 = vld [vmem:[%s365 + $0x8] sm:$0xff]
        %v387 = vld [vmem:[%s4] sm:$0x1]
        %389 = vset.pattern.permute.xlu0 0
        %390 = vperm.xlu0 %389, %v385
        %v391 = vpop.permute.xlu0 %390
        %394 = vset.pattern.permute.xlu0 0
        %395 = vperm.xlu0 %394, %v386
        %v396 = vpop.permute.xlu0 %395
        %v399 = vperm.slane %v387, 0
        %v401 = vmul.f32 %v391, %v399
        %v402 = vmul.f32 %v396, %v399
        %v403 = vadd.f32 %v383, %v401
        %v404 = vadd.f32 %v384, %v402
        %v405 = vld [vmem:[%s5] sm:$0x1]
        %v407 = vperm.slane %v405, 0
        %v409 = vadd.f32 %v403, %v407
        %v410 = vadd.f32 %v404, %v407
        %v411 = vld [vmem:[%s312] sm:$0xf]
        %v412 = vld [vmem:[%s312 + $0x4] sm:$0xf]
        %vm413 = vcmp.gt.f32.partialorder %v409, 0.0
        %vm414 = vcmp.gt.f32.partialorder %v410, 0.0
        %v415 = vmul.f32 %v409, 0.01
        %v416 = vmul.f32 %v410, 0.01
        %v417 = vsel %vm413, %v409, %v415
        %v418 = vsel %vm414, %v410, %v416
        %v419 = vpack.c.bf16 %v418, %v417
        %v422 = vunpack.c.l.b16 %v411
        %v423 = vunpack.c.l.b16 %v412
        %v424 = vpack.c.b16 %v423, %v422
        %vm425 = vcmask 130048
        %v427 = vsel %vm425, %v424, 0
        %429 = vmatpush.bf16.msra.mxu0 0
        %430 = vmatpush.bf16.msra.mxu0 0
        %431 = vmatpush.bf16.msra.mxu0 0
        %432 = vmatpush.bf16.msra.mxu0 0
        %433 = vmatpush.bf16.msra.mxu0 0
        %434 = vmatpush.bf16.msra.mxu0 0
        %435 = vmatpush.bf16.msra.mxu0 0
        %436 = vmatpush.bf16.msra.mxu0 %v419
        %437 = vmatmul.bf16.gmra.mxu0 %v427
        %v438 = vpop.f32.mrf.mxu0
        %v439 = vadd.f32 0.0, %v438
        %v440 = vpop.f32.mrf.mxu0
        %v441 = vadd.f32 0.0, %v440
        %442 = vdwg.mxu0
        %v443 = vpack.c.bf16 %v441, %v439
        %v444 = vld [vmem:[%s6] sm:$0xf]
        %v445 = vld [vmem:[%s6 + $0x4] sm:$0xf]
        %v446 = vld [vmem:[%s6 + $0x8] sm:$0xf]
        %v447 = vld [vmem:[%s6 + $0xc] sm:$0xf]
        %v448 = vld [vmem:[%s6 + $0x10] sm:$0xf]
        %v449 = vld [vmem:[%s6 + $0x14] sm:$0xf]
        %v450 = vld [vmem:[%s6 + $0x18] sm:$0xf]
        %v451 = vld [vmem:[%s6 + $0x1c] sm:$0xf]
        %v452 = vld [vmem:[%s6 + $0x20] sm:$0xf]
        %v453 = vld [vmem:[%s6 + $0x24] sm:$0xf]
        %v454 = vld [vmem:[%s6 + $0x28] sm:$0xf]
        %v455 = vld [vmem:[%s6 + $0x2c] sm:$0xf]
        %v456 = vld [vmem:[%s6 + $0x30] sm:$0xf]
        %v457 = vld [vmem:[%s6 + $0x34] sm:$0xf]
        %v458 = vld [vmem:[%s6 + $0x38] sm:$0xf]
        %v459 = vld [vmem:[%s6 + $0x3c] sm:$0xf]
        %v460 = vld [vmem:[%s7] sm:$0x1]
        %v462 = vperm.slane %v460, 0
        %v480 = vunpack.c.l.b16 %v444
        %v481 = vunpack.c.l.b16 %v445
        %v482 = vunpack.c.l.b16 %v446
        %v483 = vunpack.c.l.b16 %v447
        %v484 = vunpack.c.l.b16 %v448
        %v485 = vunpack.c.l.b16 %v449
        %v486 = vunpack.c.l.b16 %v450
        %v487 = vunpack.c.l.b16 %v451
        %v488 = vunpack.c.l.b16 %v452
        %v489 = vunpack.c.l.b16 %v453
        %v490 = vunpack.c.l.b16 %v454
        %v491 = vunpack.c.l.b16 %v455
        %v492 = vunpack.c.l.b16 %v456
        %v493 = vunpack.c.l.b16 %v457
        %v494 = vunpack.c.l.b16 %v458
        %v495 = vunpack.c.l.b16 %v459
        %v496 = vpack.c.b16 %v481, %v480
        %v497 = vpack.c.b16 %v483, %v482
        %v498 = vpack.c.b16 %v485, %v484
        %v499 = vpack.c.b16 %v487, %v486
        %v500 = vpack.c.b16 %v489, %v488
        %v501 = vpack.c.b16 %v491, %v490
        %v502 = vpack.c.b16 %v493, %v492
        %v503 = vpack.c.b16 %v495, %v494
        %512 = vmatpush.bf16.msra.mxu0 %v503
        %513 = vmatpush.bf16.msra.mxu0 %v502
        %514 = vmatpush.bf16.msra.mxu0 %v501
        %515 = vmatpush.bf16.msra.mxu0 %v500
        %516 = vmatpush.bf16.msra.mxu0 %v499
        %517 = vmatpush.bf16.msra.mxu0 %v498
        %518 = vmatpush.bf16.msra.mxu0 %v497
        %519 = vmatpush.bf16.msra.mxu0 %v496
        %520 = vmatmul.bf16.gmra.mxu0 %v443
        %v521 = vpop.f32.mrf.mxu0
        %v522 = vadd.f32 %v462, %v521
        %v523 = vpop.f32.mrf.mxu0
        %v524 = vadd.f32 %v462, %v523
        %525 = vdwg.mxu0
        %vm526 = vcmp.gt.f32.partialorder %v522, 0.0
        %vm527 = vcmp.gt.f32.partialorder %v524, 0.0
        %v528 = vmul.f32 %v522, 0.01
        %v529 = vmul.f32 %v524, 0.01
        %v530 = vsel %vm526, %v522, %v528
        %v531 = vsel %vm527, %v524, %v529
        %v532 = vpack.c.bf16 %v531, %v530
        %533 = vmatpush.bf16.msra.mxu0 0
        %534 = vmatpush.bf16.msra.mxu0 0
        %535 = vmatpush.bf16.msra.mxu0 0
        %536 = vmatpush.bf16.msra.mxu0 0
        %537 = vmatpush.bf16.msra.mxu0 0
        %538 = vmatpush.bf16.msra.mxu0 0
        %539 = vmatpush.bf16.msra.mxu0 0
        %540 = vmatpush.bf16.msra.mxu0 %v532
        %541 = vmatmul.bf16.gmra.mxu0 %v427
        %v542 = vpop.f32.mrf.mxu0
        %v543 = vadd.f32 0.0, %v542
        %v544 = vpop.f32.mrf.mxu0
        %v545 = vadd.f32 0.0, %v544
        %546 = vdwg.mxu0
        %v547 = vpack.c.bf16 %v545, %v543
        %s548 = scalar_lea.vmem %s6, 64
        %v549 = vld [vmem:[%s548] sm:$0xf]
        %v550 = vld [vmem:[%s548 + $0x4] sm:$0xf]
        %v551 = vld [vmem:[%s548 + $0x8] sm:$0xf]
        %v552 = vld [vmem:[%s548 + $0xc] sm:$0xf]
        %v553 = vld [vmem:[%s548 + $0x10] sm:$0xf]
        %v554 = vld [vmem:[%s548 + $0x14] sm:$0xf]
        %v555 = vld [vmem:[%s548 + $0x18] sm:$0xf]
        %v556 = vld [vmem:[%s548 + $0x1c] sm:$0xf]
        %v557 = vld [vmem:[%s548 + $0x20] sm:$0xf]
        %v558 = vld [vmem:[%s548 + $0x24] sm:$0xf]
        %v559 = vld [vmem:[%s548 + $0x28] sm:$0xf]
        %v560 = vld [vmem:[%s548 + $0x2c] sm:$0xf]
        %v561 = vld [vmem:[%s548 + $0x30] sm:$0xf]
        %v562 = vld [vmem:[%s548 + $0x34] sm:$0xf]
        %v563 = vld [vmem:[%s548 + $0x38] sm:$0xf]
        %v564 = vld [vmem:[%s548 + $0x3c] sm:$0xf]
        %s565 = scalar_lea.vmem %s7, 1
        %v566 = vld [vmem:[%s565] sm:$0x1]
        %v568 = vperm.slane %v566, 0
        %v586 = vunpack.c.l.b16 %v549
        %v587 = vunpack.c.l.b16 %v550
        %v588 = vunpack.c.l.b16 %v551
        %v589 = vunpack.c.l.b16 %v552
        %v590 = vunpack.c.l.b16 %v553
        %v591 = vunpack.c.l.b16 %v554
        %v592 = vunpack.c.l.b16 %v555
        %v593 = vunpack.c.l.b16 %v556
        %v594 = vunpack.c.l.b16 %v557
        %v595 = vunpack.c.l.b16 %v558
        %v596 = vunpack.c.l.b16 %v559
        %v597 = vunpack.c.l.b16 %v560
        %v598 = vunpack.c.l.b16 %v561
        %v599 = vunpack.c.l.b16 %v562
        %v600 = vunpack.c.l.b16 %v563
        %v601 = vunpack.c.l.b16 %v564
        %v602 = vpack.c.b16 %v587, %v586
        %v603 = vpack.c.b16 %v589, %v588
        %v604 = vpack.c.b16 %v591, %v590
        %v605 = vpack.c.b16 %v593, %v592
        %v606 = vpack.c.b16 %v595, %v594
        %v607 = vpack.c.b16 %v597, %v596
        %v608 = vpack.c.b16 %v599, %v598
        %v609 = vpack.c.b16 %v601, %v600
        %618 = vmatpush.bf16.msra.mxu0 %v609
        %619 = vmatpush.bf16.msra.mxu0 %v608
        %620 = vmatpush.bf16.msra.mxu0 %v607
        %621 = vmatpush.bf16.msra.mxu0 %v606
        %622 = vmatpush.bf16.msra.mxu0 %v605
        %623 = vmatpush.bf16.msra.mxu0 %v604
        %624 = vmatpush.bf16.msra.mxu0 %v603
        %625 = vmatpush.bf16.msra.mxu0 %v602
        %626 = vmatmul.bf16.gmra.mxu0 %v547
        %v627 = vpop.f32.mrf.mxu0
        %v628 = vadd.f32 %v568, %v627
        %v629 = vpop.f32.mrf.mxu0
        %v630 = vadd.f32 %v568, %v629
        %631 = vdwg.mxu0
        %632 = vst [vmem:[%s355] sm:$0xff] %v628
        %633 = vst [vmem:[%s355 + $0x8] sm:$0xff] %v630
        %s634 = sand.u32 %s216, 1
        %s635 = scalar_lea.sflag [#allocation4], %s634
        %s636 = sand.u32 %s216, 1
        %s637 = smul.addr %s636, 16
        %s638 = scalar_lea.vmem [#allocation5], %s637
        // Predicated region
        $region57: #{tpu_custom_call.1} parent=51 // pred_check
          %p639 = pneg %p226
        $region58: #{tpu_custom_call.1} parent=51 // pred_check_branch
          %641 = sbr.rel (%p639) target = $region60
        $region59: #{tpu_custom_call.1} parent=51 // pred_region
          %643 = vsyncadd %s635, 0
          %s644 = smul.addr %s25, 2
          %s645 = smul.addr %s644, 8
          %s646 = scalar_lea.hbm %s8, %s645
          %s647 = sshll.u32 %s638, 4
          %s648 = int_to_ptr.vmem [resolvable:$true] %s647
          %s649 = sshll.u32 %s646, 4
          %s650 = int_to_ptr.hbm [resolvable:$true] %s649
          %655 = dma.vmem_to_hbm [thread:$0]  %s648, 256, %s650, %s635, 128, 128, 8
        $region60: #{tpu_custom_call.1} parent=51 // pred_fallthru
          _
      $region52: #{tpu_custom_call.1} parent=5 // pred_fallthru
        _
      %p656 = scmp.le.s32.totalorder 2, %s20
      // Predicated region
      $region61: #{tpu_custom_call.1} parent=5 // pred_check
        %p657 = pneg %p656
      $region62: #{tpu_custom_call.1} parent=5 // pred_check_branch
        %659 = sbr.rel (%p657) target = $region64
      $region63: #{tpu_custom_call.1} parent=5 // pred_region
        %s660 = ssub.s32 %s20, 2
        // Predicated region
        $region65: #{tpu_custom_call.1} parent=63 // pred_check
          %p661 = pneg %p232
        $region66: #{tpu_custom_call.1} parent=63 // pred_check_branch
          %663 = sbr.rel (%p661) target = $region68
        $region67: #{tpu_custom_call.1} parent=63 // pred_region
          %s664 = sand.u32 %s217, 1
          %s665 = scalar_lea.sflag [#allocation4], %s664
          %s666 = sand.u32 %s217, 1
          %s667 = smul.addr %s666, 16
          %s668 = scalar_lea.vmem [#allocation5], %s667
          %670 = dma.done %s665, 256
        $region68: #{tpu_custom_call.1} parent=63 // pred_fallthru
          _
      $region64: #{tpu_custom_call.1} parent=5 // pred_fallthru
        _
    $region6: #{tpu_custom_call.1} parent=1 // loop_footer
      %s24 = sadd.s32 1, %s20
    $region7: #{tpu_custom_call.1} parent=1 // loop_footer_branch
      %19 = sbr.rel target = $region3
    $region8: #{tpu_custom_call.1} parent=1 // loop_exit
      _
    %671 = vsyncpa [#allocation3], 1
    %s672 = scalar_lea.sflag [#allocation3], 1
    %673 = vsyncpa %s672, 1
    %674 = vsyncpa [#allocation4], 1
    %s675 = scalar_lea.sflag [#allocation4], 1
    %676 = vsyncpa %s675, 1

</llo_original>
